<compile_context>
chip_gen: v5e
topology: v5e:2x2
jax: 0.10.0
libtpu: 0.0.40
codegen_flags: <defaults>
</compile_context>

<pallas_src>
import jax
import jax.numpy as jnp
from jax.experimental import pallas as pl
from jax.experimental.pallas import tpu as pltpu

# ----- model hyperparameters (mirroring the PyTorch script) -----------------
sentences = ['i like cat', 'i love coffee', 'i hate milk']
sentences_list = ' '.join(sentences).split()
vocab = sorted(set(sentences_list))
max_len = len(vocab)            # vocabulary size (= 7); also the output dim
n_hidden = 10
n_step = 2
word_embedding_dim = 2

V = max_len
E = word_embedding_dim
NS = n_step
H = n_hidden

# ----- packed / padded layout constants --------------------------------------
LANES = 128                      # vreg lane width
B_PAD = 8                        # sublane-padded batch tile (f32 -> 8 rows)
ONE_LANE = NS * V                # lane 14: constant-1 bias selector
H_START = ONE_LANE + 1           # lanes 15..24: hidden activations h
K_FULL = 128                     # full-depth contraction (no sub-128 lane slices)


# ----- Pallas kernel ---------------------------------------------------------
def nnlm_kernel(tok_ref, w1_ref, w2_ref, out_ref):
    """tok_ref: (B, n_step) int32 in SMEM.
       w1_ref / w2_ref: (128, 128) f32 zero-padded weight slabs in VMEM.
       out_ref: (B_PAD, 128) f32 lane-dense logits tile."""
    B = tok_ref.shape[0]
    col = jax.lax.broadcasted_iota(jnp.int32, (B_PAD, LANES), 1)
    row = jax.lax.broadcasted_iota(jnp.int32, (B_PAD, LANES), 0)

    # Fused embedding "gather": build the one-hot selector tile S_aug.
    #   lane s*V + tok[b, s] = 1   and   lane ONE_LANE = 1 (bias term), row-gated.
    # De-serialized: bias compare hoisted out of the loop, each row's mask built
    # independently, single OR-reduce + one select at the end.
    bias_hit = col == ONE_LANE
    row_masks = []
    for b in range(B):                       # tiny static loops (B * n_step compares)
        row_hit = bias_hit
        for s in range(NS):
            row_hit = row_hit | (col == s * V + tok_ref[b, s])
        row_masks.append((row == b) & row_hit)
    hit = row_masks[0]
    for m in row_masks[1:]:
        hit = hit | m
    s_aug = jnp.where(hit, 1.0, 0.0)         # (B_PAD, 128) f32; rows >= B stay all-zero

    w1 = w1_ref[...]
    w2 = w2_ref[...]

    # Hidden layer: full-depth K=128 dot (same MXU passes as K=16, no lane slice).
    # pre_h is zero outside lanes [H_START, H_START+H) and tanh(0) == 0, so the
    # h-path dot below only picks up the W_o rows of W2.
    pre_h = jnp.dot(s_aug, w1, preferred_element_type=jnp.float32)

    # Output layer, distributed around the tanh so the s_aug @ W2 push does not
    # wait behind the EUP tanh / dot-1 result pop:
    #   out = (b_o + x @ W_io) + h @ W_o
    out_io = jnp.dot(s_aug, w2, preferred_element_type=jnp.float32)
    out_h = jnp.dot(jnp.tanh(pre_h), w2, preferred_element_type=jnp.float32)
    # TODO(synk): at scaled batch, cast to bf16 before the store to halve output
    # HBM writeback (keep the arithmetic in f32 — v5e VPU/EUP have no bf16 ALU).
    out_ref[...] = out_io + out_h


# ----- host-side weight packing (call-invariant, amortized) -------------------
def pack_params(params):
    """Fold the embedding table into the first-layer weights (everything before the
    tanh is linear) and zero-pad both layers to full (128, 128) contraction slabs."""
    emb_table, w_h, b_h, w_io, b_o, w_o = params

    # Row s*V + v of the effective weights corresponds to "token v in context slot s".
    w1_eff = jnp.concatenate(
        [emb_table @ w_h[s * E:(s + 1) * E, :] for s in range(NS)], axis=0)   # (NS*V, H)
    wio_eff = jnp.concatenate(
        [emb_table @ w_io[s * E:(s + 1) * E, :] for s in range(NS)], axis=0)  # (NS*V, V)

    w1 = jnp.zeros((K_FULL, LANES), jnp.float32)
    w1 = w1.at[0:NS * V, H_START:H_START + H].set(w1_eff)
    w1 = w1.at[ONE_LANE, H_START:H_START + H].set(b_h)

    w2 = jnp.zeros((K_FULL, LANES), jnp.float32)
    w2 = w2.at[0:NS * V, 0:V].set(wio_eff)
    w2 = w2.at[ONE_LANE, 0:V].set(b_o)
    w2 = w2.at[H_START:H_START + H, 0:V].set(w_o)

    return w1, w2


@jax.jit
def nnlm_forward(tokens, w1, w2):
    """tokens: (B, n_step) int32 ids in [0, max_len). Returns (B, max_len) f32 logits."""
    B = tokens.shape[0]
    assert B <= B_PAD
    # TODO(synk): for large B, add a batch-tiled grid (>=512-row sublane tiles,
    # dimension_semantics=("parallel",) to use both v7x TensorCores, tokens DMA'd as
    # a lane-replicated VMEM tile) and fold repeated calls into one pallas_call.
    out_padded = pl.pallas_call(
        nnlm_kernel,
        out_shape=jax.ShapeDtypeStruct((B_PAD, LANES), jnp.float32),
        # No grid: single un-pipelined invocation (no 1-step pipeline prologue/
        # epilogue, no pointless double-buffering of the ~128 KiB of weights).
        in_specs=[
            pl.BlockSpec(memory_space=pltpu.MemorySpace.SMEM),   # token ids (scalars)
            pl.BlockSpec(memory_space=pltpu.MemorySpace.VMEM),   # W1 slab
            pl.BlockSpec(memory_space=pltpu.MemorySpace.VMEM),   # W2 slab
        ],
        out_specs=pl.BlockSpec(memory_space=pltpu.MemorySpace.VMEM),
    )(tokens.astype(jnp.int32), w1, w2)
    return out_padded[:B, :max_len]


def init_params(key):
    k = jax.random.split(key, 6)
    emb_table = jax.random.normal(k[0], (max_len, word_embedding_dim), jnp.float32)
    w_h = jax.random.normal(k[1], (n_step * word_embedding_dim, n_hidden), jnp.float32)
    b_h = jax.random.normal(k[2], (n_hidden,), jnp.float32)
    w_io = jax.random.normal(k[3], (n_step * word_embedding_dim, max_len), jnp.float32)
    b_o = jax.random.normal(k[4], (max_len,), jnp.float32)
    w_o = jax.random.normal(k[5], (n_hidden, max_len), jnp.float32)
    return emb_table, w_h, b_h, w_io, b_o, w_o


if __name__ == "__main__":
    key = jax.random.PRNGKey(0)
    params = init_params(key)
    w1, w2 = pack_params(params)            # packed once; reused across calls

    # Build the input batch exactly like the demo: first n_step words per sentence.
    word2idx = {w: i for i, w in enumerate(vocab)}
    tokens = jnp.array(
        [[word2idx[w] for w in s.split()[:n_step]] for s in sentences],
        dtype=jnp.int32,
    )                                       # (3, 2)
    # Out-of-range ids would silently miss every one-hot lane -> validate on host.
    assert int(tokens.min()) >= 0 and int(tokens.max()) < max_len

    logits = nnlm_forward(tokens, w1, w2)
    logits = jax.block_until_ready(logits)

    # Pure-JAX reference of the original NNLM forward.
    emb_table, w_h, b_h, w_io, b_o, w_o = params
    x = emb_table[tokens].reshape(tokens.shape[0], -1)
    h = jnp.tanh(b_h + x @ w_h)
    ref = b_o + x @ w_io + h @ w_o
    assert logits.shape == (tokens.shape[0], max_len)
    assert jnp.allclose(logits, ref, atol=1e-4, rtol=1e-4)

    print("KERNEL_OK")
</pallas_src>

<mosaic_0001>
module attributes {stable_mosaic.version = 11 : i64} {
  func.func @nnlm_kernel(%arg0: memref<3x2xi32, #tpu.memory_space<smem>>, %arg1: memref<128x128xf32, #tpu.memory_space<vmem>>, %arg2: memref<128x128xf32, #tpu.memory_space<vmem>>, %arg3: memref<8x128xf32, #tpu.memory_space<vmem>>) attributes {dimension_semantics = [], scalar_prefetch = 0 : i64, scratch_operands = 0 : i64, tpu.core_type = #tpu.core_type<tc>} {
    %0 = tpu.iota {dimensions = array<i32: 1>} : vector<8x128xi32>
    %1 = tpu.iota {dimensions = array<i32: 0>} : vector<8x128xi32>
    %c14_i32 = arith.constant 14 : i32
    %2 = vector.broadcast %c14_i32 : i32 to vector<8x128xi32>
    %3 = arith.cmpi eq, %0, %2 : vector<8x128xi32>
    %c0 = arith.constant 0 : index
    %c0_0 = arith.constant 0 : index
    %4 = memref.load %arg0[%c0, %c0_0] : memref<3x2xi32, #tpu.memory_space<smem>>
    %c0_i32 = arith.constant 0 : i32
    %5 = arith.addi %c0_i32, %4 : i32
    %6 = vector.broadcast %5 : i32 to vector<8x128xi32>
    %7 = arith.cmpi eq, %0, %6 : vector<8x128xi32>
    %8 = arith.ori %3, %7 : vector<8x128xi1>
    %c0_1 = arith.constant 0 : index
    %c1 = arith.constant 1 : index
    %9 = memref.load %arg0[%c0_1, %c1] : memref<3x2xi32, #tpu.memory_space<smem>>
    %c7_i32 = arith.constant 7 : i32
    %10 = arith.addi %c7_i32, %9 : i32
    %11 = vector.broadcast %10 : i32 to vector<8x128xi32>
    %12 = arith.cmpi eq, %0, %11 : vector<8x128xi32>
    %13 = arith.ori %8, %12 : vector<8x128xi1>
    %c0_i32_2 = arith.constant 0 : i32
    %14 = vector.broadcast %c0_i32_2 : i32 to vector<8x128xi32>
    %15 = arith.cmpi eq, %1, %14 : vector<8x128xi32>
    %16 = arith.andi %15, %13 : vector<8x128xi1>
    %c1_3 = arith.constant 1 : index
    %c0_4 = arith.constant 0 : index
    %17 = memref.load %arg0[%c1_3, %c0_4] : memref<3x2xi32, #tpu.memory_space<smem>>
    %c0_i32_5 = arith.constant 0 : i32
    %18 = arith.addi %c0_i32_5, %17 : i32
    %19 = vector.broadcast %18 : i32 to vector<8x128xi32>
    %20 = arith.cmpi eq, %0, %19 : vector<8x128xi32>
    %21 = arith.ori %3, %20 : vector<8x128xi1>
    %c1_6 = arith.constant 1 : index
    %c1_7 = arith.constant 1 : index
    %22 = memref.load %arg0[%c1_6, %c1_7] : memref<3x2xi32, #tpu.memory_space<smem>>
    %c7_i32_8 = arith.constant 7 : i32
    %23 = arith.addi %c7_i32_8, %22 : i32
    %24 = vector.broadcast %23 : i32 to vector<8x128xi32>
    %25 = arith.cmpi eq, %0, %24 : vector<8x128xi32>
    %26 = arith.ori %21, %25 : vector<8x128xi1>
    %c1_i32 = arith.constant 1 : i32
    %27 = vector.broadcast %c1_i32 : i32 to vector<8x128xi32>
    %28 = arith.cmpi eq, %1, %27 : vector<8x128xi32>
    %29 = arith.andi %28, %26 : vector<8x128xi1>
    %c2 = arith.constant 2 : index
    %c0_9 = arith.constant 0 : index
    %30 = memref.load %arg0[%c2, %c0_9] : memref<3x2xi32, #tpu.memory_space<smem>>
    %c0_i32_10 = arith.constant 0 : i32
    %31 = arith.addi %c0_i32_10, %30 : i32
    %32 = vector.broadcast %31 : i32 to vector<8x128xi32>
    %33 = arith.cmpi eq, %0, %32 : vector<8x128xi32>
    %34 = arith.ori %3, %33 : vector<8x128xi1>
    %c2_11 = arith.constant 2 : index
    %c1_12 = arith.constant 1 : index
    %35 = memref.load %arg0[%c2_11, %c1_12] : memref<3x2xi32, #tpu.memory_space<smem>>
    %c7_i32_13 = arith.constant 7 : i32
    %36 = arith.addi %c7_i32_13, %35 : i32
    %37 = vector.broadcast %36 : i32 to vector<8x128xi32>
    %38 = arith.cmpi eq, %0, %37 : vector<8x128xi32>
    %39 = arith.ori %34, %38 : vector<8x128xi1>
    %c2_i32 = arith.constant 2 : i32
    %40 = vector.broadcast %c2_i32 : i32 to vector<8x128xi32>
    %41 = arith.cmpi eq, %1, %40 : vector<8x128xi32>
    %42 = arith.andi %41, %39 : vector<8x128xi1>
    %43 = arith.ori %16, %29 : vector<8x128xi1>
    %44 = arith.ori %43, %42 : vector<8x128xi1>
    %cst = arith.constant 1.000000e+00 : f32
    %cst_14 = arith.constant 0.000000e+00 : f32
    %45 = vector.broadcast %cst : f32 to vector<8x128xf32>
    %46 = vector.broadcast %cst_14 : f32 to vector<8x128xf32>
    %47 = arith.select %44, %45, %46 : vector<8x128xi1>, vector<8x128xf32>
    %c0_15 = arith.constant 0 : index
    %c0_16 = arith.constant 0 : index
    %48 = vector.load %arg1[%c0_15, %c0_16] : memref<128x128xf32, #tpu.memory_space<vmem>>, vector<128x128xf32>
    %c0_17 = arith.constant 0 : index
    %c0_18 = arith.constant 0 : index
    %49 = vector.load %arg2[%c0_17, %c0_18] : memref<128x128xf32, #tpu.memory_space<vmem>>, vector<128x128xf32>
    %cst_19 = arith.constant dense<0.000000e+00> : vector<8x128xf32>
    %50 = tpu.matmul %47, %48, %cst_19 {dimension_numbers = #tpu.dot_dimension_numbers<[1], [0], [0], [1], [0, 0, 1, 1], [], []>} : vector<8x128xf32>, vector<128x128xf32>, vector<8x128xf32> -> vector<8x128xf32>
    %cst_20 = arith.constant dense<0.000000e+00> : vector<8x128xf32>
    %51 = tpu.matmul %47, %49, %cst_20 {dimension_numbers = #tpu.dot_dimension_numbers<[1], [0], [0], [1], [0, 0, 1, 1], [], []>} : vector<8x128xf32>, vector<128x128xf32>, vector<8x128xf32> -> vector<8x128xf32>
    %52 = math.tanh %50 : vector<8x128xf32>
    %cst_21 = arith.constant dense<0.000000e+00> : vector<8x128xf32>
    %53 = tpu.matmul %52, %49, %cst_21 {dimension_numbers = #tpu.dot_dimension_numbers<[1], [0], [0], [1], [0, 0, 1, 1], [], []>} : vector<8x128xf32>, vector<128x128xf32>, vector<8x128xf32> -> vector<8x128xf32>
    %54 = arith.addf %51, %53 : vector<8x128xf32>
    %c0_22 = arith.constant 0 : index
    %c0_23 = arith.constant 0 : index
    %55 = vector.load %arg3[%c0_22, %c0_23] : memref<8x128xf32, #tpu.memory_space<vmem>>, vector<8x128xf32>
    tpu.vector_store %arg3[%c0_22, %c0_23], %54 {strides = array<i32>} : memref<8x128xf32, #tpu.memory_space<vmem>>, vector<8x128xf32>,
    return
  }
}

</mosaic_0001>

<llo_original>
// kernel: nnlm_forward.1
$region0: #{nnlm_forward.1}
  #allocation0 [shape = 'u32[]', space=smem, size = 0x4, offset = 0x4, fixed_abs, tag = 'smem constant byte address 0x4 - core index']
  #allocation1 [shape = 'u32[72,128]{1,0:T(1,128)}', space=vmem, size = 0x9000, scoped, tag = 'internal scratch']
  %s0 = inlined_call_operand.vmem [shape: s32[3,2], index: 0, kind: input, shape index: {}]
  %s1 = inlined_call_operand.hbm [shape: f32[128,128], index: 1, kind: input, shape index: {}]
  %s2 = inlined_call_operand.hbm [shape: f32[128,128], index: 2, kind: input, shape index: {}]
  %s3 = inlined_call_operand.vmem [shape: f32[8,128], index: 3, kind: output, shape index: {}]
  %s4 = sld [smem:[#allocation0]]
  $region34: #{nnlm_forward.1} parent=0
    _
  %s6 = ssub.s32 1, %s4
  %s7 = scalar_select 0, %s6, %s4
  $region1: #{nnlm_forward.1} parent=0
    #allocation2 [shape = 'u8[2048]{0}', space=smem, size = 0x800, scoped, tag = 'input window, operand 0, single buffered']
    #allocation3 [shape = 's32[1]{0}', space=sflag, size = 0x4, scoped, tag = 'scoped memory for nnlm_forward.1']
    #allocation4 [shape = 's32[1]{0}', space=sflag, size = 0x4, scoped, tag = 'scoped memory for nnlm_forward.1']
    #allocation5 [shape = 'u8[65536]{0}', space=vmem, size = 0x10000, scoped, tag = 'input window, operand 1, single buffered']
    #allocation6 [shape = 'u8[65536]{0}', space=vmem, size = 0x10000, scoped, tag = 'input window, operand 2, single buffered']
    #allocation7 [shape = 's32[1]{0}', space=sflag, size = 0x4, scoped, tag = 'scoped memory for nnlm_forward.1']
    %8 = vsyncpa [#allocation4], 0
    %9 = vsyncpa [#allocation3], 0
    %10 = vsyncpa [#allocation7], 0
    // Predicated region
    $region2: #{nnlm_forward.1} parent=1 // pred_check
      _
    $region3: #{nnlm_forward.1} parent=1 // pred_check_branch
      %12 = sbr.rel (0) target = $region5
    $region4: #{nnlm_forward.1} parent=1 // pred_region
      %14 = vsyncadd [#allocation4], 0
      %s16 = sshll.u32 %s0, 4
      %s17 = int_to_ptr.vmem [resolvable:$true] %s16
      %19 = dma.vmem_to_smem %s17, 64, [#allocation2], [#allocation4]
    $region5: #{nnlm_forward.1} parent=1 // pred_fallthru
      _
    // Predicated region
    $region6: #{nnlm_forward.1} parent=1 // pred_check
      _
    $region7: #{nnlm_forward.1} parent=1 // pred_check_branch
      %21 = sbr.rel (0) target = $region9
    $region8: #{nnlm_forward.1} parent=1 // pred_region
      %23 = vsyncadd [#allocation3], 0
      %s24 = sshll.u32 %s1, 4
      %s25 = int_to_ptr.hbm [resolvable:$true] %s24
      %s26 = sshll.u32 [#allocation5], 4
      %s27 = int_to_ptr.vmem [resolvable:$true] %s26
      %32 = dma.hbm_to_vmem [thread:$0]  %s25, 2048, %s27, [#allocation3], 128, 128, 8
    $region9: #{nnlm_forward.1} parent=1 // pred_fallthru
      _
    // Predicated region
    $region10: #{nnlm_forward.1} parent=1 // pred_check
      _
    $region11: #{nnlm_forward.1} parent=1 // pred_check_branch
      %34 = sbr.rel (0) target = $region13
    $region12: #{nnlm_forward.1} parent=1 // pred_region
      %36 = vsyncadd [#allocation7], 0
      %s37 = sshll.u32 %s2, 4
      %s38 = int_to_ptr.hbm [resolvable:$true] %s37
      %s39 = sshll.u32 [#allocation6], 4
      %s40 = int_to_ptr.vmem [resolvable:$true] %s39
      %45 = dma.hbm_to_vmem [thread:$0]  %s38, 2048, %s40, [#allocation7], 128, 128, 8
    $region13: #{nnlm_forward.1} parent=1 // pred_fallthru
      _
    // Predicated region
    $region14: #{nnlm_forward.1} parent=1 // pred_check
      _
    $region15: #{nnlm_forward.1} parent=1 // pred_check_branch
      %47 = sbr.rel (0) target = $region17
    $region16: #{nnlm_forward.1} parent=1 // pred_region
      %49 = dma.done [#allocation4], 64
    $region17: #{nnlm_forward.1} parent=1 // pred_fallthru
      _
    // Predicated region
    $region18: #{nnlm_forward.1} parent=1 // pred_check
      _
    $region19: #{nnlm_forward.1} parent=1 // pred_check_branch
      %51 = sbr.rel (0) target = $region21
    $region20: #{nnlm_forward.1} parent=1 // pred_region
      %53 = dma.done [#allocation3], 2048
    $region21: #{nnlm_forward.1} parent=1 // pred_fallthru
      _
    // Predicated region
    $region22: #{nnlm_forward.1} parent=1 // pred_check
      _
    $region23: #{nnlm_forward.1} parent=1 // pred_check_branch
      %55 = sbr.rel (0) target = $region25
    $region24: #{nnlm_forward.1} parent=1 // pred_region
      %57 = dma.done [#allocation7], 2048
    $region25: #{nnlm_forward.1} parent=1 // pred_fallthru
      _
    %58 = sfence
    %v59 = vlaneseq
    %v60 = vand.u32 %v59, 127
    %v61 = vlaneseq
    %v62 = vshrl.u32 %v61, 7
    %vm63 = vcmp.eq.s32.totalorder %v60, 14
    %s64 = sld [smem:[#allocation2]]
    %v65 = vstv %s64
    %vm66 = vcmp.eq.s32.totalorder %v60, %v65
    %vm67 = vmor %vm63, %vm66
    %s68 = sld [smem:[#allocation2 + $0x1]]
    %s69 = sadd.s32 %s68, 7
    %v70 = vstv %s69
    %vm71 = vcmp.eq.s32.totalorder %v60, %v70
    %vm72 = vmor %vm67, %vm71
    %vm73 = vcmp.eq.s32.totalorder %v62, 0
    %vm74 = vmand %vm73, %vm72
    %s75 = sld [smem:[#allocation2 + $0x80]]
    %v76 = vstv %s75
    %vm77 = vcmp.eq.s32.totalorder %v60, %v76
    %vm78 = vmor %vm63, %vm77
    %s79 = sld [smem:[#allocation2 + $0x81]]
    %s80 = sadd.s32 %s79, 7
    %v81 = vstv %s80
    %vm82 = vcmp.eq.s32.totalorder %v60, %v81
    %vm83 = vmor %vm78, %vm82
    %vm84 = vcmp.eq.s32.totalorder %v62, 1
    %vm85 = vmand %vm84, %vm83
    %s86 = sld [smem:[#allocation2 + $0x100]]
    %v87 = vstv %s86
    %vm88 = vcmp.eq.s32.totalorder %v60, %v87
    %vm89 = vmor %vm63, %vm88
    %s90 = sld [smem:[#allocation2 + $0x101]]
    %s91 = sadd.s32 %s90, 7
    %v92 = vstv %s91
    %vm93 = vcmp.eq.s32.totalorder %v60, %v92
    %vm94 = vmor %vm89, %vm93
    %vm95 = vcmp.eq.s32.totalorder %v62, 2
    %vm96 = vmand %vm95, %vm94
    %vm97 = vmor %vm74, %vm85
    %vm98 = vmor %vm97, %vm96
    %v99 = vsel %vm98, 1.0, 0.0
    %v100 = vld [vmem:[#allocation5] sm:$0xff]
    %v101 = vld [vmem:[#allocation5 + $0x8] sm:$0xff]
    %v102 = vld [vmem:[#allocation5 + $0x10] sm:$0xff]
    %v103 = vld [vmem:[#allocation5 + $0x18] sm:$0xff]
    %v104 = vld [vmem:[#allocation5 + $0x20] sm:$0xff]
    %v105 = vld [vmem:[#allocation5 + $0x28] sm:$0xff]
    %v106 = vld [vmem:[#allocation5 + $0x30] sm:$0xff]
    %v107 = vld [vmem:[#allocation5 + $0x38] sm:$0xff]
    %v108 = vld [vmem:[#allocation5 + $0x40] sm:$0xff]
    %v109 = vld [vmem:[#allocation5 + $0x48] sm:$0xff]
    %v110 = vld [vmem:[#allocation5 + $0x50] sm:$0xff]
    %v111 = vld [vmem:[#allocation5 + $0x58] sm:$0xff]
    %v112 = vld [vmem:[#allocation5 + $0x60] sm:$0xff]
    %v113 = vld [vmem:[#allocation5 + $0x68] sm:$0xff]
    %v114 = vld [vmem:[#allocation5 + $0x70] sm:$0xff]
    %v115 = vld [vmem:[#allocation5 + $0x78] sm:$0xff]
    %v116 = vld [vmem:[#allocation6] sm:$0xff]
    %v117 = vld [vmem:[#allocation6 + $0x8] sm:$0xff]
    %v118 = vld [vmem:[#allocation6 + $0x10] sm:$0xff]
    %v119 = vld [vmem:[#allocation6 + $0x18] sm:$0xff]
    %v120 = vld [vmem:[#allocation6 + $0x20] sm:$0xff]
    %v121 = vld [vmem:[#allocation6 + $0x28] sm:$0xff]
    %v122 = vld [vmem:[#allocation6 + $0x30] sm:$0xff]
    %v123 = vld [vmem:[#allocation6 + $0x38] sm:$0xff]
    %v124 = vld [vmem:[#allocation6 + $0x40] sm:$0xff]
    %v125 = vld [vmem:[#allocation6 + $0x48] sm:$0xff]
    %v126 = vld [vmem:[#allocation6 + $0x50] sm:$0xff]
    %v127 = vld [vmem:[#allocation6 + $0x58] sm:$0xff]
    %v128 = vld [vmem:[#allocation6 + $0x60] sm:$0xff]
    %v129 = vld [vmem:[#allocation6 + $0x68] sm:$0xff]
    %v130 = vld [vmem:[#allocation6 + $0x70] sm:$0xff]
    %v131 = vld [vmem:[#allocation6 + $0x78] sm:$0xff]
    %132 = vmatpush.msra.mxu0 %v115
    %133 = vmatpush.msra.mxu0 %v114
    %134 = vmatpush.msra.mxu0 %v113
    %135 = vmatpush.msra.mxu0 %v112
    %136 = vmatpush.msra.mxu0 %v111
    %137 = vmatpush.msra.mxu0 %v110
    %138 = vmatpush.msra.mxu0 %v109
    %139 = vmatpush.msra.mxu0 %v108
    %140 = vmatpush.msra.mxu0 %v107
    %141 = vmatpush.msra.mxu0 %v106
    %142 = vmatpush.msra.mxu0 %v105
    %143 = vmatpush.msra.mxu0 %v104
    %144 = vmatpush.msra.mxu0 %v103
    %145 = vmatpush.msra.mxu0 %v102
    %146 = vmatpush.msra.mxu0 %v101
    %147 = vmatpush.msra.mxu0 %v100
    %148 = vmatmul.f32.gmra.mxu0 %v99
    %v149 = vpop.f32.mrf.mxu0
    %v150 = vadd.f32 0.0, %v149
    %151 = vdwg.mxu0
    %v152 = vtanh.pop %v150
    %153 = vmatpush.msra.mxu0 %v131
    %154 = vmatpush.msra.mxu0 %v130
    %155 = vmatpush.msra.mxu0 %v129
    %156 = vmatpush.msra.mxu0 %v128
    %157 = vmatpush.msra.mxu0 %v127
    %158 = vmatpush.msra.mxu0 %v126
    %159 = vmatpush.msra.mxu0 %v125
    %160 = vmatpush.msra.mxu0 %v124
    %161 = vmatpush.msra.mxu0 %v123
    %162 = vmatpush.msra.mxu0 %v122
    %163 = vmatpush.msra.mxu0 %v121
    %164 = vmatpush.msra.mxu0 %v120
    %165 = vmatpush.msra.mxu0 %v119
    %166 = vmatpush.msra.mxu0 %v118
    %167 = vmatpush.msra.mxu0 %v117
    %168 = vmatpush.msra.mxu0 %v116
    %169 = vmatmul.f32.gmra.mxu0 %v152
    %v170 = vpop.f32.mrf.mxu0
    %v171 = vadd.f32 0.0, %v170
    %172 = vdwg.mxu0
    %173 = vmatpush.msra.mxu0 %v131
    %174 = vmatpush.msra.mxu0 %v130
    %175 = vmatpush.msra.mxu0 %v129
    %176 = vmatpush.msra.mxu0 %v128
    %177 = vmatpush.msra.mxu0 %v127
    %178 = vmatpush.msra.mxu0 %v126
    %179 = vmatpush.msra.mxu0 %v125
    %180 = vmatpush.msra.mxu0 %v124
    %181 = vmatpush.msra.mxu0 %v123
    %182 = vmatpush.msra.mxu0 %v122
    %183 = vmatpush.msra.mxu0 %v121
    %184 = vmatpush.msra.mxu0 %v120
    %185 = vmatpush.msra.mxu0 %v119
    %186 = vmatpush.msra.mxu0 %v118
    %187 = vmatpush.msra.mxu0 %v117
    %188 = vmatpush.msra.mxu0 %v116
    %189 = vmatmul.f32.gmra.mxu0 %v99
    %v190 = vpop.f32.mrf.mxu0
    %v191 = vadd.f32 %v171, %v190
    %192 = vdwg.mxu0
    %193 = vst [vmem:[%s3] sm:$0xff] %v191
    // Predicated region
    $region26: #{nnlm_forward.1} parent=1 // pred_check
      _
    $region27: #{nnlm_forward.1} parent=1 // pred_check_branch
      %195 = sbr.rel (0) target = $region29
    $region28: #{nnlm_forward.1} parent=1 // pred_region
      _
    $region29: #{nnlm_forward.1} parent=1 // pred_fallthru
      _
    // Predicated region
    $region30: #{nnlm_forward.1} parent=1 // pred_check
      _
    $region31: #{nnlm_forward.1} parent=1 // pred_check_branch
      %197 = sbr.rel (0) target = $region33
    $region32: #{nnlm_forward.1} parent=1 // pred_region
      _
    $region33: #{nnlm_forward.1} parent=1 // pred_fallthru
      _
    %198 = vsyncpa [#allocation3], 1
    %199 = vsyncpa [#allocation7], 1
    %200 = vsyncpa [#allocation4], 1

</llo_original>
